<compile_context>
chip_gen: v6e
topology: v6e:2x2x1
jax: 0.10.0
libtpu: 0.0.40
codegen_flags: <defaults>
</compile_context>

<pallas_src>
import functools
import math

import jax
import jax.numpy as jnp
from jax.experimental import pallas as pl
from jax.experimental.pallas import tpu as pltpu

VMEM_LIMIT = 32 * 1024 * 1024   # safe on v5e/v6e/v7x; tiles stay well under it
MM_TILE_M = 512                 # M-tile for the 1x1/matmul kernel


# ----------------------------------------------------------------------------
# Kernel bodies
# ----------------------------------------------------------------------------
def _mm_kernel(*refs, act, has_scale, has_res, reduce_mean, m_total, tm):
    """Fused (tile of M, K) @ (K, N) + bias (+ SE scale, + residual, + act,
    optionally accumulating a column-sum for fused global average pooling)."""
    idx = 0
    scale_ref = None
    if has_scale:
        scale_ref = refs[idx]
        idx += 1
    x_ref, w_ref, b_ref = refs[idx], refs[idx + 1], refs[idx + 2]
    idx += 3
    res_ref = refs[idx] if has_res else None
    o_ref = refs[-1]

    x = x_ref[0]                                             # (tm, K) bf16
    if has_scale:
        x = (x.astype(jnp.float32) * scale_ref[0]).astype(jnp.bfloat16)
    y = jnp.dot(x, w_ref[...], preferred_element_type=jnp.float32)
    y = y + b_ref[...]                                       # f32 epilogue
    if act == "silu":
        y = y * jax.nn.sigmoid(y)
    elif act == "sigmoid":
        y = jax.nn.sigmoid(y)
    if has_res:
        y = y + res_ref[0].astype(jnp.float32)

    if reduce_mean:
        i = pl.program_id(1)
        row = jax.lax.broadcasted_iota(jnp.int32, y.shape, 0) + i * tm
        y = jnp.where(row < m_total, y, 0.0)                 # mask ragged tail

        @pl.when(i == 0)
        def _():
            o_ref[...] = jnp.zeros_like(o_ref)

        o_ref[...] = o_ref[...] + jnp.sum(y, axis=0).reshape(o_ref.shape)
    else:
        o_ref[0] = y.astype(o_ref.dtype)


def _conv3_kernel(*refs, n_in, taps, wo, act, has_res):
    """One output row of a 3x3 conv: 9 shifted (Wo, Cin) @ (Cin, Cout) matmuls
    accumulated in f32, + bias + act (+ fused residual)."""
    row_refs = refs[:n_in]
    w_ref = refs[n_in]                                       # (9, Cin, Cout)
    b_ref = refs[n_in + 1]                                   # (1, Cout)
    res_ref = refs[n_in + 2] if has_res else None
    o_ref = refs[-1]

    rows = {}
    for (ri, _off) in taps:
        if ri not in rows:
            rows[ri] = row_refs[ri][0, 0]                    # (Wp, Cin) bf16

    cout = w_ref.shape[-1]
    acc = jnp.zeros((wo, cout), jnp.float32)
    for k, (ri, off) in enumerate(taps):
        patch = rows[ri][off:off + wo, :]                    # (Wo, Cin)
        acc = acc + jnp.dot(patch, w_ref[k],
                            preferred_element_type=jnp.float32)
    acc = acc + b_ref[...]
    if act == "silu":
        acc = acc * jax.nn.sigmoid(acc)
    if has_res:
        acc = acc + res_ref[0, 0].astype(jnp.float32)
    o_ref[0, 0] = acc.astype(o_ref.dtype)


def _dw_kernel(*refs, n_in, taps, wo):
    """One output row of a depthwise 3x3 conv + BN + SiLU, and accumulation of
    the per-channel spatial sum (for the fused SE squeeze)."""
    row_refs = refs[:n_in]
    w_ref = refs[n_in]                                       # (9, 1, C) f32
    b_ref = refs[n_in + 1]                                   # (1, C)  f32
    o_ref = refs[n_in + 2]                                   # (1,1,Wo,C)
    s_ref = refs[n_in + 3]                                   # (1,1,C) f32 acc

    rows = {}
    for (ri, _off) in taps:
        if ri not in rows:
            rows[ri] = row_refs[ri][0, 0]                    # (Wp, C) bf16

    c = w_ref.shape[-1]
    acc = jnp.zeros((wo, c), jnp.float32)
    for k, (ri, off) in enumerate(taps):
        acc = acc + rows[ri][off:off + wo, :].astype(jnp.float32) * w_ref[k]
    acc = acc + b_ref[...]
    acc = acc * jax.nn.sigmoid(acc)                          # SiLU
    o_ref[0, 0] = acc.astype(o_ref.dtype)

    oy = pl.program_id(1)

    @pl.when(oy == 0)
    def _():
        s_ref[...] = jnp.zeros_like(s_ref)

    s_ref[...] = s_ref[...] + jnp.sum(acc, axis=0).reshape(s_ref.shape)


def _se_kernel(s_ref, w1_ref, b1_ref, w2_ref, b2_ref, o_ref, *, inv_hw):
    """Fused SE: spatial-mean scaling + fc1 + SiLU + fc2 + sigmoid."""
    m = s_ref[...] * inv_hw                                  # (B, C) f32
    h = jnp.dot(m, w1_ref[...], preferred_element_type=jnp.float32) + b1_ref[...]
    h = h * jax.nn.sigmoid(h)
    g = jnp.dot(h, w2_ref[...], preferred_element_type=jnp.float32) + b2_ref[...]
    o_ref[...] = jax.nn.sigmoid(g)


# ----------------------------------------------------------------------------
# Pallas wrappers
# ----------------------------------------------------------------------------
def matmul_fused(x, w, b, *, act="none", scale=None, residual=None,
                 reduce_mean=False, out_dtype=jnp.bfloat16):
    """x: (B, M, K); w: (K, N); b: (N,).  Grid (B, M-tiles), bf16 MXU, f32 acc."""
    B, M, K = x.shape
    N = w.shape[-1]
    tm = min(MM_TILE_M, M)
    grid = (B, pl.cdiv(M, tm))

    in_specs, args = [], []
    if scale is not None:
        in_specs.append(pl.BlockSpec((1, 1, K), lambda bb, ii: (bb, 0, 0)))
        args.append(scale.reshape(B, 1, K).astype(jnp.float32))
    in_specs.append(pl.BlockSpec((1, tm, K), lambda bb, ii: (bb, ii, 0)))
    args.append(x.astype(jnp.bfloat16))
    in_specs.append(pl.BlockSpec((K, N), lambda bb, ii: (0, 0)))
    args.append(w.astype(jnp.bfloat16))
    in_specs.append(pl.BlockSpec((1, N), lambda bb, ii: (0, 0)))
    args.append(b.reshape(1, N).astype(jnp.float32))
    if residual is not None:
        in_specs.append(pl.BlockSpec((1, tm, N), lambda bb, ii: (bb, ii, 0)))
        args.append(residual.astype(jnp.bfloat16))

    if reduce_mean:
        out_specs = pl.BlockSpec((1, 1, N), lambda bb, ii: (bb, 0, 0))
        out_shape = jax.ShapeDtypeStruct((B, 1, N), jnp.float32)
        dims = ("parallel", "arbitrary")
    else:
        out_specs = pl.BlockSpec((1, tm, N), lambda bb, ii: (bb, ii, 0))
        out_shape = jax.ShapeDtypeStruct((B, M, N), out_dtype)
        dims = ("parallel", "parallel")

    kernel = functools.partial(
        _mm_kernel, act=act, has_scale=scale is not None,
        has_res=residual is not None, reduce_mean=reduce_mean,
        m_total=M, tm=tm)
    return pl.pallas_call(
        kernel, grid=grid, in_specs=in_specs, out_specs=out_specs,
        out_shape=out_shape,
        compiler_params=pltpu.CompilerParams(
            dimension_semantics=dims, vmem_limit_bytes=VMEM_LIMIT),
    )(*args)


def _conv_out_size(n, stride):
    return (n - 1) // stride + 1            # kernel=3, padding=1


def _row_tap_setup(xp, stride):
    """Row-shifted views of the padded input + static (ref, col-offset) taps."""
    if stride == 1:
        arrays = [xp, xp, xp]
        maps = [(lambda bb, oy, dy=dy: (bb, oy + dy, 0, 0)) for dy in range(3)]
        widths = [xp.shape[2]] * 3
        taps = tuple((dy, dx) for dy in range(3) for dx in range(3))
    else:  # stride == 2: even/odd column split keeps in-kernel slices contiguous
        xe = xp[:, :, 0::2, :]
        xo = xp[:, :, 1::2, :]
        arrays = [xe, xe, xe, xo, xo, xo]
        maps = [(lambda bb, oy, dy=dy: (bb, 2 * oy + dy, 0, 0))
                for dy in range(3)] * 2
        widths = [xe.shape[2]] * 3 + [xo.shape[2]] * 3
        taps = []
        for dy in range(3):
            for dx in range(3):
                if dx == 0:
                    taps.append((dy, 0))        # even cols, offset 0
                elif dx == 1:
                    taps.append((3 + dy, 0))    # odd  cols, offset 0
                else:
                    taps.append((dy, 1))        # even cols, offset 1
        taps = tuple(taps)
    return arrays, maps, widths, taps


def conv3x3_bn_act(x, w9, bias, stride, act="silu", residual=None):
    """3x3 conv (pad=1) + folded BN + act (+ fused residual).  x: (B,H,W,Cin)."""
    B, H, W, cin = x.shape
    cout = w9.shape[-1]
    ho, wo = _conv_out_size(H, stride), _conv_out_size(W, stride)
    xp = jnp.pad(x, ((0, 0), (1, 1), (1, 1), (0, 0)))
    arrays, maps, widths, taps = _row_tap_setup(xp, stride)
    n_in = len(arrays)

    in_specs = [pl.BlockSpec((1, 1, widths[r], cin), maps[r]) for r in range(n_in)]
    args = list(arrays)
    in_specs.append(pl.BlockSpec((9, cin, cout), lambda bb, oy: (0, 0, 0)))
    args.append(w9)
    in_specs.append(pl.BlockSpec((1, cout), lambda bb, oy: (0, 0)))
    args.append(bias.reshape(1, cout).astype(jnp.float32))
    has_res = residual is not None
    if has_res:
        in_specs.append(pl.BlockSpec((1, 1, wo, cout), lambda bb, oy: (bb, oy, 0, 0)))
        args.append(residual.astype(jnp.bfloat16))

    kernel = functools.partial(_conv3_kernel, n_in=n_in, taps=taps, wo=wo,
                               act=act, has_res=has_res)
    return pl.pallas_call(
        kernel, grid=(B, ho),
        in_specs=in_specs,
        out_specs=pl.BlockSpec((1, 1, wo, cout), lambda bb, oy: (bb, oy, 0, 0)),
        out_shape=jax.ShapeDtypeStruct((B, ho, wo, cout), jnp.bfloat16),
        compiler_params=pltpu.CompilerParams(
            dimension_semantics=("parallel", "parallel"),
            vmem_limit_bytes=VMEM_LIMIT),
    )(*args)


def depthwise3x3_bn_silu(x, w9, bias, stride):
    """Depthwise 3x3 + folded BN + SiLU; also returns per-channel spatial sums
    (fused SE squeeze).  x: (B,H,W,C) -> (B,Ho,Wo,C) bf16, (B,1,C) f32."""
    B, H, W, c = x.shape
    ho, wo = _conv_out_size(H, stride), _conv_out_size(W, stride)
    xp = jnp.pad(x, ((0, 0), (1, 1), (1, 1), (0, 0)))
    arrays, maps, widths, taps = _row_tap_setup(xp, stride)
    n_in = len(arrays)

    in_specs = [pl.BlockSpec((1, 1, widths[r], c), maps[r]) for r in range(n_in)]
    args = list(arrays)
    in_specs.append(pl.BlockSpec((9, 1, c), lambda bb, oy: (0, 0, 0)))
    args.append(w9)
    in_specs.append(pl.BlockSpec((1, c), lambda bb, oy: (0, 0)))
    args.append(bias.reshape(1, c).astype(jnp.float32))

    kernel = functools.partial(_dw_kernel, n_in=n_in, taps=taps, wo=wo)
    out, sums = pl.pallas_call(
        kernel, grid=(B, ho),
        in_specs=in_specs,
        out_specs=[pl.BlockSpec((1, 1, wo, c), lambda bb, oy: (bb, oy, 0, 0)),
                   pl.BlockSpec((1, 1, c), lambda bb, oy: (bb, 0, 0))],
        out_shape=[jax.ShapeDtypeStruct((B, ho, wo, c), jnp.bfloat16),
                   jax.ShapeDtypeStruct((B, 1, c), jnp.float32)],
        compiler_params=pltpu.CompilerParams(
            dimension_semantics=("parallel", "arbitrary"),
            vmem_limit_bytes=VMEM_LIMIT),
    )(*args)
    return out, sums


def se_scale(sums, w1, b1, w2, b2, inv_hw):
    """Fused SE gate from pre-accumulated channel sums: (B, C) -> (B, C)."""
    B, c = sums.shape
    csq = w1.shape[-1]
    return pl.pallas_call(
        functools.partial(_se_kernel, inv_hw=inv_hw),
        grid=(1,),
        in_specs=[pl.BlockSpec((B, c), lambda i: (0, 0)),
                  pl.BlockSpec((c, csq), lambda i: (0, 0)),
                  pl.BlockSpec((1, csq), lambda i: (0, 0)),
                  pl.BlockSpec((csq, c), lambda i: (0, 0)),
                  pl.BlockSpec((1, c), lambda i: (0, 0))],
        out_specs=pl.BlockSpec((B, c), lambda i: (0, 0)),
        out_shape=jax.ShapeDtypeStruct((B, c), jnp.float32),
        compiler_params=pltpu.CompilerParams(
            dimension_semantics=("arbitrary",), vmem_limit_bytes=VMEM_LIMIT),
    )(sums, w1, b1.reshape(1, csq), w2, b2.reshape(1, c))


# ----------------------------------------------------------------------------
# Parameter init (deterministic, eval-mode BN folded to scale/bias)
# ----------------------------------------------------------------------------
class KeyGen:
    def __init__(self, seed=0):
        self.key = jax.random.PRNGKey(seed)

    def __call__(self):
        self.key, sub = jax.random.split(self.key)
        return sub


def bn_fold(gamma, beta, mean, var, eps=1e-3):
    scale = gamma / jnp.sqrt(var + eps)
    bias = beta - mean * scale
    return scale, bias


def _bn_scale_bias(kg, cout):
    gamma = jnp.ones((cout,), jnp.float32)
    beta = 0.01 * jax.random.normal(kg(), (cout,), jnp.float32)
    return bn_fold(gamma, beta, jnp.zeros((cout,)), jnp.ones((cout,)))


def _conv3_params(kg, cin, cout):
    std = math.sqrt(2.0 / (9 * cin))
    w = jax.random.normal(kg(), (3, 3, cin, cout), jnp.float32) * std
    scale, bias = _bn_scale_bias(kg, cout)
    w9 = (w * scale[None, None, None, :]).reshape(9, cin, cout)
    return {"w9": w9.astype(jnp.bfloat16), "bias": bias.astype(jnp.float32)}


def _conv1_params(kg, cin, cout):
    std = math.sqrt(2.0 / cin)
    w = jax.random.normal(kg(), (cin, cout), jnp.float32) * std
    scale, bias = _bn_scale_bias(kg, cout)
    return {"w": (w * scale[None, :]).astype(jnp.bfloat16),
            "bias": bias.astype(jnp.float32)}


def _dw_params(kg, c):
    std = math.sqrt(2.0 / 9.0)
    w = jax.random.normal(kg(), (3, 3, c), jnp.float32) * std
    scale, bias = _bn_scale_bias(kg, c)
    w9 = (w.reshape(9, c) * scale[None, :]).reshape(9, 1, c)
    return {"w9": w9.astype(jnp.float32), "bias": bias.astype(jnp.float32)}


def _se_params(kg, cexp, csq):
    return {
        "w1": jax.random.normal(kg(), (cexp, csq), jnp.float32) * math.sqrt(1.0 / cexp),
        "b1": jnp.zeros((csq,), jnp.float32),
        "w2": jax.random.normal(kg(), (csq, cexp), jnp.float32) * math.sqrt(1.0 / csq),
        "b2": jnp.zeros((cexp,), jnp.float32),
    }


# EfficientNetV2-M: (block_type, expand_ratio, kernel, stride, in_ch, out_ch, layers)
EFFNET_V2_M_CONFIG = [
    ("fused", 1, 3, 1, 24, 24, 3),
    ("fused", 4, 3, 2, 24, 48, 5),
    ("fused", 4, 3, 2, 48, 80, 5),
    ("mbconv", 4, 3, 2, 80, 160, 7),
    ("mbconv", 6, 3, 1, 160, 176, 14),
    ("mbconv", 6, 3, 2, 176, 304, 18),
    ("mbconv", 6, 3, 1, 304, 512, 5),
]
HEAD_CHANNELS = 1280   # = features.classifier[1].in_features (embedd_len)


def init_fused_block(kg, expand, cin, cout):
    if expand != 1:
        cexp = cin * expand
        return {"expand": _conv3_params(kg, cin, cexp),
                "project": _conv1_params(kg, cexp, cout)}
    return {"single": _conv3_params(kg, cin, cout)}


def init_mbconv_block(kg, expand, cin, cout):
    cexp = cin * expand
    csq = max(1, cin // 4)
    return {"expand": _conv1_params(kg, cin, cexp),
            "dw": _dw_params(kg, cexp),
            "se": _se_params(kg, cexp, csq),
            "project": _conv1_params(kg, cexp, cout)}


def fused_block(x, p, expand, stride, cin, cout):
    B, H, W, _ = x.shape
    use_res = (stride == 1 and cin == cout)
    if expand == 1:
        res = x if use_res else None
        return conv3x3_bn_act(x, p["single"]["w9"], p["single"]["bias"],
                              stride, act="silu", residual=res)
    h = conv3x3_bn_act(x, p["expand"]["w9"], p["expand"]["bias"],
                       stride, act="silu")
    _, ho, wo, cexp = h.shape
    res = x.reshape(B, H * W, cin) if use_res else None
    y = matmul_fused(h.reshape(B, ho * wo, cexp),
                     p["project"]["w"], p["project"]["bias"],
                     act="none", residual=res)
    return y.reshape(B, ho, wo, cout)


def mbconv_block(x, p, expand, stride, cin, cout):
    B, H, W, _ = x.shape
    cexp = cin * expand
    use_res = (stride == 1 and cin == cout)
    h = matmul_fused(x.reshape(B, H * W, cin),
                     p["expand"]["w"], p["expand"]["bias"], act="silu")
    h = h.reshape(B, H, W, cexp)
    h, sums = depthwise3x3_bn_silu(h, p["dw"]["w9"], p["dw"]["bias"], stride)
    _, ho, wo, _ = h.shape
    gate = se_scale(sums.reshape(B, cexp), p["se"]["w1"], p["se"]["b1"],
                    p["se"]["w2"], p["se"]["b2"], inv_hw=1.0 / float(ho * wo))
    res = x.reshape(B, H * W, cin) if use_res else None
    y = matmul_fused(h.reshape(B, ho * wo, cexp),
                     p["project"]["w"], p["project"]["bias"],
                     act="none", scale=gate, residual=res)
    return y.reshape(B, ho, wo, cout)


class EfficientV2MImageEmbeddPallas:
    """Pallas/JAX equivalent of EfficientV2MImageEmbedd.forward (eval mode)."""

    def __init__(self, num_input_channels, seed=0):
        kg = KeyGen(seed)
        self.in_channels = num_input_channels
        self.embedd_len = HEAD_CHANNELS
        self.params = {}
        if num_input_channels != 3:
            std = math.sqrt(1.0 / num_input_channels)
            self.params["mapping_conv"] = {
                "w": jax.random.normal(kg(), (num_input_channels, 3), jnp.float32) * std,
                "b": 0.01 * jax.random.normal(kg(), (3,), jnp.float32),
            }
        self.params["stem"] = _conv3_params(kg, 3, 24)
        blocks = []
        for (btype, expand, _k, stride, cin, cout, n_layers) in EFFNET_V2_M_CONFIG:
            for li in range(n_layers):
                in_c = cin if li == 0 else cout
                s = stride if li == 0 else 1
                bp = (init_fused_block(kg, expand, in_c, cout) if btype == "fused"
                      else init_mbconv_block(kg, expand, in_c, cout))
                blocks.append((btype, expand, s, in_c, cout, bp))
        self.blocks = blocks
        self.params["head"] = _conv1_params(kg, 512, HEAD_CHANNELS)

    def __call__(self, image_nchw):
        # NCHW (PyTorch) -> NHWC (kernel layout), bf16 activations
        x = jnp.transpose(image_nchw, (0, 2, 3, 1)).astype(jnp.bfloat16)
        B, H, W, C = x.shape
        if self.in_channels != 3:
            p = self.params["mapping_conv"]
            x = matmul_fused(x.reshape(B, H * W, C), p["w"], p["b"], act="none")
            x = x.reshape(B, H, W, 3)
        p = self.params["stem"]
        x = conv3x3_bn_act(x, p["w9"], p["bias"], stride=2, act="silu")
        for (btype, expand, s, in_c, out_c, bp) in self.blocks:
            if btype == "fused":
                x = fused_block(x, bp, expand, s, in_c, out_c)
            else:
                x = mbconv_block(x, bp, expand, s, in_c, out_c)
        # head 1x1 conv + BN + SiLU fused with AdaptiveAvgPool2d(1) + flatten
        p = self.params["head"]
        B, Hf, Wf, Cf = x.shape
        sums = matmul_fused(x.reshape(B, Hf * Wf, Cf), p["w"], p["bias"],
                            act="silu", reduce_mean=True)
        embedd = sums.reshape(B, HEAD_CHANNELS) / float(Hf * Wf)
        return embedd


if __name__ == "__main__":
    key = jax.random.PRNGKey(0)
    image = jax.random.normal(key, (2, 4, 32, 32), jnp.float32)   # NCHW, 4 != 3 channels
    model = EfficientV2MImageEmbeddPallas(num_input_channels=4, seed=0)
    embedd = model(image)
    embedd = jax.block_until_ready(embedd)
    assert embedd.shape == (2, model.embedd_len) == (2, 1280), embedd.shape
    assert bool(jnp.all(jnp.isfinite(embedd)))
    print("KERNEL_OK")
</pallas_src>

<mosaic_0001>
module attributes {stable_mosaic.version = 11 : i64} {
  func.func @_mm_kernel(%arg0: i32, %arg1: i32, %arg2: memref<1x512x4xbf16, #tpu.memory_space<vmem>>, %arg3: memref<4x3xbf16, #tpu.memory_space<vmem>>, %arg4: memref<1x3xf32, #tpu.memory_space<vmem>>, %arg5: memref<1x512x3xbf16, #tpu.memory_space<vmem>>) attributes {dimension_semantics = [#tpu.dimension_semantics<parallel>, #tpu.dimension_semantics<parallel>], iteration_bounds = array<i64: 2, 2>, scalar_prefetch = 0 : i64, scratch_operands = 0 : i64, tpu.core_type = #tpu.core_type<tc>, window_params = [{transform_indices = @transform_0, window_bounds = array<i64: 1, 512, 4>}, {pipeline_mode = #tpu.pipeline_mode<synchronous>, transform_indices = @transform_1, window_bounds = array<i64: 4, 3>}, {pipeline_mode = #tpu.pipeline_mode<synchronous>, transform_indices = @transform_2, window_bounds = array<i64: 1, 3>}, {transform_indices = @transform_3, window_bounds = array<i64: 1, 512, 3>}]} {
    %c0 = arith.constant 0 : index
    %c0_0 = arith.constant 0 : index
    %c0_1 = arith.constant 0 : index
    %0 = vector.load %arg2[%c0, %c0_0, %c0_1] : memref<1x512x4xbf16, #tpu.memory_space<vmem>>, vector<1x512x4xbf16>
    %1 = vector.shape_cast %0 : vector<1x512x4xbf16> to vector<512x4xbf16>
    %c0_2 = arith.constant 0 : index
    %c0_3 = arith.constant 0 : index
    %2 = vector.load %arg3[%c0_2, %c0_3] : memref<4x3xbf16, #tpu.memory_space<vmem>>, vector<4x3xbf16>
    %cst = arith.constant dense<0.000000e+00> : vector<512x3xf32>
    %3 = tpu.matmul %1, %2, %cst {dimension_numbers = #tpu.dot_dimension_numbers<[1], [0], [0], [1], [0, 0, 1, 1], [], []>} : vector<512x4xbf16>, vector<4x3xbf16>, vector<512x3xf32> -> vector<512x3xf32>
    %c0_4 = arith.constant 0 : index
    %c0_5 = arith.constant 0 : index
    %4 = vector.load %arg4[%c0_4, %c0_5] : memref<1x3xf32, #tpu.memory_space<vmem>>, vector<1x3xf32>
    %5 = vector.broadcast %4 : vector<1x3xf32> to vector<512x3xf32>
    %6 = arith.addf %3, %5 : vector<512x3xf32>
    %7 = arith.truncf %6 : vector<512x3xf32> to vector<512x3xbf16>
    %c0_6 = arith.constant 0 : index
    %c0_7 = arith.constant 0 : index
    %c0_8 = arith.constant 0 : index
    %8 = vector.load %arg5[%c0_6, %c0_7, %c0_8] : memref<1x512x3xbf16, #tpu.memory_space<vmem>>, vector<1x512x3xbf16>
    %9 = vector.shape_cast %8 : vector<1x512x3xbf16> to vector<512x3xbf16>
    %10 = vector.shape_cast %7 : vector<512x3xbf16> to vector<1x512x3xbf16>
    tpu.vector_store %arg5[%c0_6, %c0_7, %c0_8], %10 {strides = array<i32>} : memref<1x512x3xbf16, #tpu.memory_space<vmem>>, vector<1x512x3xbf16>,
    return
  }
  func.func @transform_0(%arg0: i32, %arg1: i32) -> (i32, i32, i32) {
    %c0_i32 = arith.constant 0 : i32
    %c0_i32_0 = arith.constant 0 : i32
    return %arg0, %arg1, %c0_i32 : i32, i32, i32
  }
  func.func @transform_1(%arg0: i32, %arg1: i32) -> (i32, i32) {
    %c0_i32 = arith.constant 0 : i32
    %c0_i32_0 = arith.constant 0 : i32
    %c0_i32_1 = arith.constant 0 : i32
    return %c0_i32, %c0_i32_0 : i32, i32
  }
  func.func @transform_2(%arg0: i32, %arg1: i32) -> (i32, i32) {
    %c0_i32 = arith.constant 0 : i32
    %c0_i32_0 = arith.constant 0 : i32
    %c0_i32_1 = arith.constant 0 : i32
    return %c0_i32, %c0_i32_0 : i32, i32
  }
  func.func @transform_3(%arg0: i32, %arg1: i32) -> (i32, i32, i32) {
    %c0_i32 = arith.constant 0 : i32
    %c0_i32_0 = arith.constant 0 : i32
    return %arg0, %arg1, %c0_i32 : i32, i32, i32
  }
}

</mosaic_0001>

<llo_original>
// kernel: tpu_custom_call.1
$region0: #{tpu_custom_call.1}
  #allocation0 [shape = 'u32[]', space=smem, size = 0x4, offset = 0x4, fixed_abs, tag = 'smem constant byte address 0x4 - core index']
  #allocation1 [shape = 'u32[144,128]{1,0:T(1,128)}', space=vmem, size = 0x12000, scoped, tag = 'internal scratch']
  %s0 = inlined_call_operand.vmem [shape: bf16[2,1024,4], index: 0, kind: input, shape index: {}]
  %s1 = inlined_call_operand.vmem [shape: bf16[4,3], index: 1, kind: input, shape index: {}]
  %s2 = inlined_call_operand.vmem [shape: f32[1,3], index: 2, kind: input, shape index: {}]
  %s3 = inlined_call_operand.vmem [shape: bf16[2,1024,3], index: 3, kind: output, shape index: {}]
  %s4 = sld [smem:[#allocation0]]
  $region45: #{tpu_custom_call.1} parent=0
    _
  %s6 = ssub.s32 1, %s4
  %s7 = scalar_select 0, %s6, %s4
  loop: start=0, step=1, limit=6
  $region2: #{tpu_custom_call.1} parent=0 // loop_pre_header
    _
  $region3: #{tpu_custom_call.1} parent=0 // loop_header
    %s9 = sphi 0, %s13
    %p10 = scmp.ge.s32.totalorder %s9, 6
    %s16 = sphi 0, %s28
    %s17 = sphi 0, %s24
    %s18 = sphi 0, %s16
    %s19 = sphi 0, %s17
    %s20 = sphi 0, %s18
    %s21 = sphi 0, %s19
    %s33 = sphi 0, %s35
    %s36 = sphi 0, %s33
    %s37 = sphi 0, %s36
    %s53 = sphi 0, %s37
    %s57 = sphi 0, %s57
    %s59 = sphi 0, %s57
    %s60 = sphi 0, %s59
    %s74 = sphi 0, %s60
    %s78 = sphi 0, %s78
    %s80 = sphi 0, %s78
    %s81 = sphi 0, %s80
    %s95 = sphi 0, %s81
    %s103 = sphi 0, %s105
    %s106 = sphi 0, %s103
    %s107 = sphi 0, %s106
    %s123 = sphi 0, %s107
  $region4: #{tpu_custom_call.1} parent=0 // loop_header_branch
    %12 = sbr.rel (%p10) target = $region8
  $region5: #{tpu_custom_call.1} parent=0 // loop_body
    %s14 = ssub.s32 %s9, 1
    %s15 = ssub.s32 %s9, 2
    %s22 = sadd.s32 1, %s17
    %p23 = scmp.ge.s32.totalorder %s22, 2
    %s24 = scalar_select %p23, 0, %s22
    %s25 = sadd.s32 1, %s16
    %s26 = scalar_select %p23, %s25, %s16
    %p27 = scmp.ge.s32.totalorder %s26, 2
    %s28 = scalar_select %p27, 0, %s26
    %s29 = ssub.s32 %s16, %s28
    %s30 = ssub.s32 %s17, %s24
    %s31 = sor.u32 %s29, %s30
    %p32 = scmp.eq.s32.totalorder %s31, 0
    %s34 = sadd.s32 %s33, 1
    %s35 = scalar_select %p32, %s33, %s34
    %p38 = pneg %p32
    %p39 = scmp.eq.s32.totalorder %s9, 3
    %p40 = por %p38, %p39
    %p41 = scmp.ne.s32.totalorder %s33, %s36
    %p42 = scmp.eq.s32.totalorder %s9, 0
    %p43 = por %p41, %p42
    %p44 = scmp.ne.s32.totalorder %s33, %s36
    %p45 = scmp.eq.s32.totalorder %s14, 3
    %p46 = por %p44, %p45
    %p47 = scmp.ne.s32.totalorder %s36, %s37
    %p48 = scmp.eq.s32.totalorder %s14, 0
    %p49 = por %p47, %p48
    %p50 = scmp.ne.s32.totalorder %s36, %s37
    %p51 = scmp.eq.s32.totalorder %s15, 3
    %p52 = por %p50, %p51
    %p54 = scmp.ne.s32.totalorder %s37, %s53
    %p55 = scmp.eq.s32.totalorder %s15, 0
    %p56 = por %p54, %p55
    %s58 = sadd.s32 %s57, 1
    %p61 = scmp.eq.s32.totalorder %s9, 3
    %p62 = scmp.ne.s32.totalorder %s57, %s59
    %p63 = scmp.eq.s32.totalorder %s9, 0
    %p64 = por %p62, %p63
    %p65 = scmp.ne.s32.totalorder %s57, %s59
    %p66 = scmp.eq.s32.totalorder %s14, 3
    %p67 = por %p65, %p66
    %p68 = scmp.ne.s32.totalorder %s59, %s60
    %p69 = scmp.eq.s32.totalorder %s14, 0
    %p70 = por %p68, %p69
    %p71 = scmp.ne.s32.totalorder %s59, %s60
    %p72 = scmp.eq.s32.totalorder %s15, 3
    %p73 = por %p71, %p72
    %p75 = scmp.ne.s32.totalorder %s60, %s74
    %p76 = scmp.eq.s32.totalorder %s15, 0
    %p77 = por %p75, %p76
    %s79 = sadd.s32 %s78, 1
    %p82 = scmp.eq.s32.totalorder %s9, 3
    %p83 = scmp.ne.s32.totalorder %s78, %s80
    %p84 = scmp.eq.s32.totalorder %s9, 0
    %p85 = por %p83, %p84
    %p86 = scmp.ne.s32.totalorder %s78, %s80
    %p87 = scmp.eq.s32.totalorder %s14, 3
    %p88 = por %p86, %p87
    %p89 = scmp.ne.s32.totalorder %s80, %s81
    %p90 = scmp.eq.s32.totalorder %s14, 0
    %p91 = por %p89, %p90
    %p92 = scmp.ne.s32.totalorder %s80, %s81
    %p93 = scmp.eq.s32.totalorder %s15, 3
    %p94 = por %p92, %p93
    %p96 = scmp.ne.s32.totalorder %s81, %s95
    %p97 = scmp.eq.s32.totalorder %s15, 0
    %p98 = por %p96, %p97
    %s99 = ssub.s32 %s16, %s28
    %s100 = ssub.s32 %s17, %s24
    %s101 = sor.u32 %s99, %s100
    %p102 = scmp.eq.s32.totalorder %s101, 0
    %s104 = sadd.s32 %s103, 1
    %s105 = scalar_select %p102, %s103, %s104
    %p108 = pneg %p102
    %p109 = scmp.eq.s32.totalorder %s9, 3
    %p110 = por %p108, %p109
    %p111 = scmp.ne.s32.totalorder %s103, %s106
    %p112 = scmp.eq.s32.totalorder %s9, 0
    %p113 = por %p111, %p112
    %p114 = scmp.ne.s32.totalorder %s103, %s106
    %p115 = scmp.eq.s32.totalorder %s14, 3
    %p116 = por %p114, %p115
    %p117 = scmp.ne.s32.totalorder %s106, %s107
    %p118 = scmp.eq.s32.totalorder %s14, 0
    %p119 = por %p117, %p118
    %p120 = scmp.ne.s32.totalorder %s106, %s107
    %p121 = scmp.eq.s32.totalorder %s15, 3
    %p122 = por %p120, %p121
    %p124 = scmp.ne.s32.totalorder %s107, %s123
    %p125 = scmp.eq.s32.totalorder %s15, 0
    %p126 = por %p124, %p125
    %p127 = scmp.le.s32.totalorder 1, %s9
    %p128 = scmp.lt.s32.totalorder %s9, 5
    %p129 = pnand %p127, %p128
    %p130 = pneg %p129
    // Predicated region
    $region9: #{tpu_custom_call.1} parent=5 // pred_check
      _
    $region10: #{tpu_custom_call.1} parent=5 // pred_check_branch
      %132 = sbr.rel (%p129) target = $region12
    $region11: #{tpu_custom_call.1} parent=5 // pred_region
      %s133 = ssub.s32 %s9, 1
      // Predicated region
      $region13: #{tpu_custom_call.1} parent=11 // pred_check
        %p134 = pneg %p70
      $region14: #{tpu_custom_call.1} parent=11 // pred_check_branch
        %136 = sbr.rel (%p134) target = $region16
      $region15: #{tpu_custom_call.1} parent=11 // pred_region
        _
      $region16: #{tpu_custom_call.1} parent=11 // pred_fallthru
        _
      // Predicated region
      $region17: #{tpu_custom_call.1} parent=11 // pred_check
        %p137 = pneg %p91
      $region18: #{tpu_custom_call.1} parent=11 // pred_check_branch
        %139 = sbr.rel (%p137) target = $region20
      $region19: #{tpu_custom_call.1} parent=11 // pred_region
        _
      $region20: #{tpu_custom_call.1} parent=11 // pred_fallthru
        _
    $region12: #{tpu_custom_call.1} parent=5 // pred_fallthru
      _
    %p140 = scmp.lt.s32.totalorder %s9, 4
    // Predicated region
    $region21: #{tpu_custom_call.1} parent=5 // pred_check
      %p141 = pneg %p140
    $region22: #{tpu_custom_call.1} parent=5 // pred_check_branch
      %143 = sbr.rel (%p141) target = $region24
    $region23: #{tpu_custom_call.1} parent=5 // pred_region
      // Predicated region
      $region25: #{tpu_custom_call.1} parent=23 // pred_check
        %p144 = pneg %p43
      $region26: #{tpu_custom_call.1} parent=23 // pred_check_branch
        %146 = sbr.rel (%p144) target = $region28
      $region27: #{tpu_custom_call.1} parent=23 // pred_region
        %s147 = smul.u32 64, %s17
        %p148 = scmp.lt.s32.totalorder %s16, 1
        %s149 = scalar_select %p148, %s16, 1
        %p150 = scmp.lt.s32.totalorder %s147, 127
        %s151 = scalar_select %p150, %s147, 127
        %s152 = smul.addr %s149, 128
        %s153 = sadd.s32 %s151, %s152
        %s154 = smul.addr %s153, 4
        %s155 = scalar_lea.vmem %s0, %s154
        %s156 = smul.u32 64, %s17
      $region28: #{tpu_custom_call.1} parent=23 // pred_fallthru
        _
    $region24: #{tpu_custom_call.1} parent=5 // pred_fallthru
      _
    %p157 = scmp.le.s32.totalorder 1, %s9
    %p158 = scmp.lt.s32.totalorder %s9, 5
    %p159 = pnand %p157, %p158
    %p160 = pneg %p159
    // Predicated region
    $region29: #{tpu_custom_call.1} parent=5 // pred_check
      _
    $region30: #{tpu_custom_call.1} parent=5 // pred_check_branch
      %162 = sbr.rel (%p159) target = $region32
    $region31: #{tpu_custom_call.1} parent=5 // pred_region
      %s163 = ssub.s32 %s9, 1
      %s164 = smul.u32 64, %s19
      %p165 = scmp.lt.s32.totalorder %s18, 1
      %s166 = scalar_select %p165, %s18, 1
      %p167 = scmp.lt.s32.totalorder %s164, 127
      %s168 = scalar_select %p167, %s164, 127
      %s169 = smul.addr %s166, 128
      %s170 = sadd.s32 %s168, %s169
      %s171 = smul.addr %s170, 4
      %s172 = scalar_lea.vmem %s0, %s171
      %p173 = pneg %p49
      %p174 = pneg %p46
      %p175 = pneg %p70
      %p176 = pneg %p67
      %p177 = pneg %p91
      %p178 = pneg %p88
      %p179 = pneg %p119
      %p180 = pneg %p116
      %s181 = smul.u32 64, %s19
      %p182 = scmp.lt.s32.totalorder %s18, 1
      %s183 = scalar_select %p182, %s18, 1
      %p184 = scmp.lt.s32.totalorder %s181, 127
      %s185 = scalar_select %p184, %s181, 127
      %s186 = smul.addr %s183, 128
      %s187 = sadd.s32 %s185, %s186
      %s188 = smul.addr %s187, 4
      %s189 = scalar_lea.vmem %s3, %s188
      %s190 = smul.u32 64, %s19
      %p191 = scmp.lt.s32.totalorder %s18, 1
      %s192 = scalar_select %p191, %s18, 1
      %p193 = scmp.lt.s32.totalorder %s190, 127
      %s194 = scalar_select %p193, %s190, 127
      %s195 = smul.addr %s192, 128
      %s196 = sadd.s32 %s194, %s195
      %s197 = smul.addr %s196, 4
      %s198 = scalar_lea.vmem %s0, %s197
      %s199 = smul.u32 64, %s19
      %s200 = smul.u32 64, %s19
      %p201 = scmp.lt.s32.totalorder %s18, 1
      %s202 = scalar_select %p201, %s18, 1
      %p203 = scmp.lt.s32.totalorder %s200, 127
      %s204 = scalar_select %p203, %s200, 127
      %s205 = smul.addr %s202, 128
      %s206 = sadd.s32 %s204, %s205
      %s207 = smul.addr %s206, 4
      %s208 = scalar_lea.vmem %s3, %s207
      %s209 = smul.u32 64, %s19
      %v211 = vld [vmem:[%s198] sm:$0xf]
      %v212 = vld [vmem:[%s198 + $0x4] sm:$0xf]
      %v213 = vld [vmem:[%s198 + $0x8] sm:$0xf]
      %v214 = vld [vmem:[%s198 + $0xc] sm:$0xf]
      %v215 = vld [vmem:[%s198 + $0x10] sm:$0xf]
      %v216 = vld [vmem:[%s198 + $0x14] sm:$0xf]
      %v217 = vld [vmem:[%s198 + $0x18] sm:$0xf]
      %v218 = vld [vmem:[%s198 + $0x1c] sm:$0xf]
      %v219 = vld [vmem:[%s198 + $0x20] sm:$0xf]
      %v220 = vld [vmem:[%s198 + $0x24] sm:$0xf]
      %v221 = vld [vmem:[%s198 + $0x28] sm:$0xf]
      %v222 = vld [vmem:[%s198 + $0x2c] sm:$0xf]
      %v223 = vld [vmem:[%s198 + $0x30] sm:$0xf]
      %v224 = vld [vmem:[%s198 + $0x34] sm:$0xf]
      %v225 = vld [vmem:[%s198 + $0x38] sm:$0xf]
      %v226 = vld [vmem:[%s198 + $0x3c] sm:$0xf]
      %v227 = vld [vmem:[%s198 + $0x40] sm:$0xf]
      %v228 = vld [vmem:[%s198 + $0x44] sm:$0xf]
      %v229 = vld [vmem:[%s198 + $0x48] sm:$0xf]
      %v230 = vld [vmem:[%s198 + $0x4c] sm:$0xf]
      %v231 = vld [vmem:[%s198 + $0x50] sm:$0xf]
      %v232 = vld [vmem:[%s198 + $0x54] sm:$0xf]
      %v233 = vld [vmem:[%s198 + $0x58] sm:$0xf]
      %v234 = vld [vmem:[%s198 + $0x5c] sm:$0xf]
      %v235 = vld [vmem:[%s198 + $0x60] sm:$0xf]
      %v236 = vld [vmem:[%s198 + $0x64] sm:$0xf]
      %v237 = vld [vmem:[%s198 + $0x68] sm:$0xf]
      %v238 = vld [vmem:[%s198 + $0x6c] sm:$0xf]
      %v239 = vld [vmem:[%s198 + $0x70] sm:$0xf]
      %v240 = vld [vmem:[%s198 + $0x74] sm:$0xf]
      %v241 = vld [vmem:[%s198 + $0x78] sm:$0xf]
      %v242 = vld [vmem:[%s198 + $0x7c] sm:$0xf]
      %v243 = vld [vmem:[%s198 + $0x80] sm:$0xf]
      %v244 = vld [vmem:[%s198 + $0x84] sm:$0xf]
      %v245 = vld [vmem:[%s198 + $0x88] sm:$0xf]
      %v246 = vld [vmem:[%s198 + $0x8c] sm:$0xf]
      %v247 = vld [vmem:[%s198 + $0x90] sm:$0xf]
      %v248 = vld [vmem:[%s198 + $0x94] sm:$0xf]
      %v249 = vld [vmem:[%s198 + $0x98] sm:$0xf]
      %v250 = vld [vmem:[%s198 + $0x9c] sm:$0xf]
      %v251 = vld [vmem:[%s198 + $0xa0] sm:$0xf]
      %v252 = vld [vmem:[%s198 + $0xa4] sm:$0xf]
      %v253 = vld [vmem:[%s198 + $0xa8] sm:$0xf]
      %v254 = vld [vmem:[%s198 + $0xac] sm:$0xf]
      %v255 = vld [vmem:[%s198 + $0xb0] sm:$0xf]
      %v256 = vld [vmem:[%s198 + $0xb4] sm:$0xf]
      %v257 = vld [vmem:[%s198 + $0xb8] sm:$0xf]
      %v258 = vld [vmem:[%s198 + $0xbc] sm:$0xf]
      %v259 = vld [vmem:[%s198 + $0xc0] sm:$0xf]
      %v260 = vld [vmem:[%s198 + $0xc4] sm:$0xf]
      %v261 = vld [vmem:[%s198 + $0xc8] sm:$0xf]
      %v262 = vld [vmem:[%s198 + $0xcc] sm:$0xf]
      %v263 = vld [vmem:[%s198 + $0xd0] sm:$0xf]
      %v264 = vld [vmem:[%s198 + $0xd4] sm:$0xf]
      %v265 = vld [vmem:[%s198 + $0xd8] sm:$0xf]
      %v266 = vld [vmem:[%s198 + $0xdc] sm:$0xf]
      %v267 = vld [vmem:[%s198 + $0xe0] sm:$0xf]
      %v268 = vld [vmem:[%s198 + $0xe4] sm:$0xf]
      %v269 = vld [vmem:[%s198 + $0xe8] sm:$0xf]
      %v270 = vld [vmem:[%s198 + $0xec] sm:$0xf]
      %v271 = vld [vmem:[%s198 + $0xf0] sm:$0xf]
      %v272 = vld [vmem:[%s198 + $0xf4] sm:$0xf]
      %v273 = vld [vmem:[%s198 + $0xf8] sm:$0xf]
      %v274 = vld [vmem:[%s198 + $0xfc] sm:$0xf]
      %v275 = vld [vmem:[%s1] sm:$0x3]
      %v276 = vld [vmem:[%s2] sm:$0x1]
      %v278 = vlaneseq
      %v279 = vshrl.u32 %v278, 7
      %v280 = vsub.s32 0, %v279
      %v281 = vrot.slane %v276, %v280
      %v347 = vunpack.c.l.b16 %v211
      %v348 = vunpack.c.l.b16 %v212
      %v349 = vunpack.c.l.b16 %v213
      %v350 = vunpack.c.l.b16 %v214
      %v351 = vunpack.c.l.b16 %v215
      %v352 = vunpack.c.l.b16 %v216
      %v353 = vunpack.c.l.b16 %v217
      %v354 = vunpack.c.l.b16 %v218
      %v355 = vunpack.c.l.b16 %v219
      %v356 = vunpack.c.l.b16 %v220
      %v357 = vunpack.c.l.b16 %v221
      %v358 = vunpack.c.l.b16 %v222
      %v359 = vunpack.c.l.b16 %v223
      %v360 = vunpack.c.l.b16 %v224
      %v361 = vunpack.c.l.b16 %v225
      %v362 = vunpack.c.l.b16 %v226
      %v363 = vunpack.c.l.b16 %v227
      %v364 = vunpack.c.l.b16 %v228
      %v365 = vunpack.c.l.b16 %v229
      %v366 = vunpack.c.l.b16 %v230
      %v367 = vunpack.c.l.b16 %v231
      %v368 = vunpack.c.l.b16 %v232
      %v369 = vunpack.c.l.b16 %v233
      %v370 = vunpack.c.l.b16 %v234
      %v371 = vunpack.c.l.b16 %v235
      %v372 = vunpack.c.l.b16 %v236
      %v373 = vunpack.c.l.b16 %v237
      %v374 = vunpack.c.l.b16 %v238
      %v375 = vunpack.c.l.b16 %v239
      %v376 = vunpack.c.l.b16 %v240
      %v377 = vunpack.c.l.b16 %v241
      %v378 = vunpack.c.l.b16 %v242
      %v379 = vunpack.c.l.b16 %v243
      %v380 = vunpack.c.l.b16 %v244
      %v381 = vunpack.c.l.b16 %v245
      %v382 = vunpack.c.l.b16 %v246
      %v383 = vunpack.c.l.b16 %v247
      %v384 = vunpack.c.l.b16 %v248
      %v385 = vunpack.c.l.b16 %v249
      %v386 = vunpack.c.l.b16 %v250
      %v387 = vunpack.c.l.b16 %v251
      %v388 = vunpack.c.l.b16 %v252
      %v389 = vunpack.c.l.b16 %v253
      %v390 = vunpack.c.l.b16 %v254
      %v391 = vunpack.c.l.b16 %v255
      %v392 = vunpack.c.l.b16 %v256
      %v393 = vunpack.c.l.b16 %v257
      %v394 = vunpack.c.l.b16 %v258
      %v395 = vunpack.c.l.b16 %v259
      %v396 = vunpack.c.l.b16 %v260
      %v397 = vunpack.c.l.b16 %v261
      %v398 = vunpack.c.l.b16 %v262
      %v399 = vunpack.c.l.b16 %v263
      %v400 = vunpack.c.l.b16 %v264
      %v401 = vunpack.c.l.b16 %v265
      %v402 = vunpack.c.l.b16 %v266
      %v403 = vunpack.c.l.b16 %v267
      %v404 = vunpack.c.l.b16 %v268
      %v405 = vunpack.c.l.b16 %v269
      %v406 = vunpack.c.l.b16 %v270
      %v407 = vunpack.c.l.b16 %v271
      %v408 = vunpack.c.l.b16 %v272
      %v409 = vunpack.c.l.b16 %v273
      %v410 = vunpack.c.l.b16 %v274
      %v411 = vpack.c.b16 %v348, %v347
      %v412 = vpack.c.b16 %v350, %v349
      %v413 = vpack.c.b16 %v352, %v351
      %v414 = vpack.c.b16 %v354, %v353
      %v415 = vpack.c.b16 %v356, %v355
      %v416 = vpack.c.b16 %v358, %v357
      %v417 = vpack.c.b16 %v360, %v359
      %v418 = vpack.c.b16 %v362, %v361
      %v419 = vpack.c.b16 %v364, %v363
      %v420 = vpack.c.b16 %v366, %v365
      %v421 = vpack.c.b16 %v368, %v367
      %v422 = vpack.c.b16 %v370, %v369
      %v423 = vpack.c.b16 %v372, %v371
      %v424 = vpack.c.b16 %v374, %v373
      %v425 = vpack.c.b16 %v376, %v375
      %v426 = vpack.c.b16 %v378, %v377
      %v427 = vpack.c.b16 %v380, %v379
      %v428 = vpack.c.b16 %v382, %v381
      %v429 = vpack.c.b16 %v384, %v383
      %v430 = vpack.c.b16 %v386, %v385
      %v431 = vpack.c.b16 %v388, %v387
      %v432 = vpack.c.b16 %v390, %v389
      %v433 = vpack.c.b16 %v392, %v391
      %v434 = vpack.c.b16 %v394, %v393
      %v435 = vpack.c.b16 %v396, %v395
      %v436 = vpack.c.b16 %v398, %v397
      %v437 = vpack.c.b16 %v400, %v399
      %v438 = vpack.c.b16 %v402, %v401
      %v439 = vpack.c.b16 %v404, %v403
      %v440 = vpack.c.b16 %v406, %v405
      %v441 = vpack.c.b16 %v408, %v407
      %v442 = vpack.c.b16 %v410, %v409
      %vm443 = vcmask 31744
      %v445 = vsel %vm443, %v411, 0
      %v448 = vsel %vm443, %v412, 0
      %v451 = vsel %vm443, %v413, 0
      %v454 = vsel %vm443, %v414, 0
      %v457 = vsel %vm443, %v415, 0
      %v460 = vsel %vm443, %v416, 0
      %v463 = vsel %vm443, %v417, 0
      %v466 = vsel %vm443, %v418, 0
      %v469 = vsel %vm443, %v419, 0
      %v472 = vsel %vm443, %v420, 0
      %v475 = vsel %vm443, %v421, 0
      %v478 = vsel %vm443, %v422, 0
      %v481 = vsel %vm443, %v423, 0
      %v484 = vsel %vm443, %v424, 0
      %v487 = vsel %vm443, %v425, 0
      %v490 = vsel %vm443, %v426, 0
      %v493 = vsel %vm443, %v427, 0
      %v496 = vsel %vm443, %v428, 0
      %v499 = vsel %vm443, %v429, 0
      %v502 = vsel %vm443, %v430, 0
      %v505 = vsel %vm443, %v431, 0
      %v508 = vsel %vm443, %v432, 0
      %v511 = vsel %vm443, %v433, 0
      %v514 = vsel %vm443, %v434, 0
      %v517 = vsel %vm443, %v435, 0
      %v520 = vsel %vm443, %v436, 0
      %v523 = vsel %vm443, %v437, 0
      %v526 = vsel %vm443, %v438, 0
      %v529 = vsel %vm443, %v439, 0
      %v532 = vsel %vm443, %v440, 0
      %v535 = vsel %vm443, %v441, 0
      %v538 = vsel %vm443, %v442, 0
      %vm540 = vcmask 1041408
      %v542 = vsel %vm540, %v275, 0
      %544 = vmatprep.subr.bf16.mxu0 0
      %545 = vmatpush1.bf16.msra.mxu0 0
      %546 = vmatprep.subr.bf16.mxu0 0
      %547 = vmatpush1.bf16.msra.mxu0 0
      %548 = vmatprep.subr.bf16.mxu0 0
      %549 = vmatpush1.bf16.msra.mxu0 0
      %550 = vmatprep.subr.bf16.mxu0 0
      %551 = vmatpush1.bf16.msra.mxu0 0
      %552 = vmatprep.subr.bf16.mxu0 0
      %553 = vmatpush1.bf16.msra.mxu0 0
      %554 = vmatprep.subr.bf16.mxu0 0
      %555 = vmatpush1.bf16.msra.mxu0 0
      %556 = vmatprep.subr.bf16.mxu0 0
      %557 = vmatpush1.bf16.msra.mxu0 0
      %558 = vmatprep.subr.bf16.mxu0 0
      %559 = vmatpush1.bf16.msra.mxu0 %v542
      %560 = vmatprep.subr.bf16.mxu0 0
      %561 = vmatpush2.bf16.msra.mxu0 0
      %562 = vmatprep.subr.bf16.mxu0 0
      %563 = vmatpush2.bf16.msra.mxu0 0
      %564 = vmatprep.subr.bf16.mxu0 0
      %565 = vmatpush2.bf16.msra.mxu0 0
      %566 = vmatprep.subr.bf16.mxu0 0
      %567 = vmatpush2.bf16.msra.mxu0 0
      %568 = vmatprep.subr.bf16.mxu0 0
      %569 = vmatpush2.bf16.msra.mxu0 0
      %570 = vmatprep.subr.bf16.mxu0 0
      %571 = vmatpush2.bf16.msra.mxu0 0
      %572 = vmatprep.subr.bf16.mxu0 0
      %573 = vmatpush2.bf16.msra.mxu0 0
      %574 = vmatprep.subr.bf16.mxu0 0
      %575 = vmatpush2.bf16.msra.mxu0 0
      %576 = vmatprep.mubr.bf16.mxu0 0
      %577 = vmatmul.mubr.bf16.gmra.mxu0 %v445
      %v578 = vpop.f32.mrf.mxu0
      %v579 = vadd.f32 %v281, %v578
      %v580 = vpop.f32.mrf.mxu0
      %v581 = vpop.f32.mrf.mxu0
      %v582 = vadd.f32 %v281, %v581
      %v583 = vpop.f32.mrf.mxu0
      %584 = vmatprep.mubr.bf16.mxu0 0
      %585 = vmatmul.mubr.bf16.gmra.mxu0 %v448
      %v586 = vpop.f32.mrf.mxu0
      %v587 = vadd.f32 %v281, %v586
      %v588 = vpop.f32.mrf.mxu0
      %v589 = vpop.f32.mrf.mxu0
      %v590 = vadd.f32 %v281, %v589
      %v591 = vpop.f32.mrf.mxu0
      %592 = vmatprep.mubr.bf16.mxu0 0
      %593 = vmatmul.mubr.bf16.gmra.mxu0 %v451
      %v594 = vpop.f32.mrf.mxu0
      %v595 = vadd.f32 %v281, %v594
      %v596 = vpop.f32.mrf.mxu0
      %v597 = vpop.f32.mrf.mxu0
      %v598 = vadd.f32 %v281, %v597
      %v599 = vpop.f32.mrf.mxu0
      %600 = vmatprep.mubr.bf16.mxu0 0
      %601 = vmatmul.mubr.bf16.gmra.mxu0 %v454
      %v602 = vpop.f32.mrf.mxu0
      %v603 = vadd.f32 %v281, %v602
      %v604 = vpop.f32.mrf.mxu0
      %v605 = vpop.f32.mrf.mxu0
      %v606 = vadd.f32 %v281, %v605
      %v607 = vpop.f32.mrf.mxu0
      %608 = vmatprep.mubr.bf16.mxu0 0
      %609 = vmatmul.mubr.bf16.gmra.mxu0 %v457
      %v610 = vpop.f32.mrf.mxu0
      %v611 = vadd.f32 %v281, %v610
      %v612 = vpop.f32.mrf.mxu0
      %v613 = vpop.f32.mrf.mxu0
      %v614 = vadd.f32 %v281, %v613
      %v615 = vpop.f32.mrf.mxu0
      %616 = vmatprep.mubr.bf16.mxu0 0
      %617 = vmatmul.mubr.bf16.gmra.mxu0 %v460
      %v618 = vpop.f32.mrf.mxu0
      %v619 = vadd.f32 %v281, %v618
      %v620 = vpop.f32.mrf.mxu0
      %v621 = vpop.f32.mrf.mxu0
      %v622 = vadd.f32 %v281, %v621
      %v623 = vpop.f32.mrf.mxu0
      %624 = vmatprep.mubr.bf16.mxu0 0
      %625 = vmatmul.mubr.bf16.gmra.mxu0 %v463
      %v626 = vpop.f32.mrf.mxu0
      %v627 = vadd.f32 %v281, %v626
      %v628 = vpop.f32.mrf.mxu0
      %v629 = vpop.f32.mrf.mxu0
      %v630 = vadd.f32 %v281, %v629
      %v631 = vpop.f32.mrf.mxu0
      %632 = vmatprep.mubr.bf16.mxu0 0
      %633 = vmatmul.mubr.bf16.gmra.mxu0 %v466
      %v634 = vpop.f32.mrf.mxu0
      %v635 = vadd.f32 %v281, %v634
      %v636 = vpop.f32.mrf.mxu0
      %v637 = vpop.f32.mrf.mxu0
      %v638 = vadd.f32 %v281, %v637
      %v639 = vpop.f32.mrf.mxu0
      %640 = vmatprep.mubr.bf16.mxu0 0
      %641 = vmatmul.mubr.bf16.gmra.mxu0 %v469
      %v642 = vpop.f32.mrf.mxu0
      %v643 = vadd.f32 %v281, %v642
      %v644 = vpop.f32.mrf.mxu0
      %v645 = vpop.f32.mrf.mxu0
      %v646 = vadd.f32 %v281, %v645
      %v647 = vpop.f32.mrf.mxu0
      %648 = vmatprep.mubr.bf16.mxu0 0
      %649 = vmatmul.mubr.bf16.gmra.mxu0 %v472
      %v650 = vpop.f32.mrf.mxu0
      %v651 = vadd.f32 %v281, %v650
      %v652 = vpop.f32.mrf.mxu0
      %v653 = vpop.f32.mrf.mxu0
      %v654 = vadd.f32 %v281, %v653
      %v655 = vpop.f32.mrf.mxu0
      %656 = vmatprep.mubr.bf16.mxu0 0
      %657 = vmatmul.mubr.bf16.gmra.mxu0 %v475
      %v658 = vpop.f32.mrf.mxu0
      %v659 = vadd.f32 %v281, %v658
      %v660 = vpop.f32.mrf.mxu0
      %v661 = vpop.f32.mrf.mxu0
      %v662 = vadd.f32 %v281, %v661
      %v663 = vpop.f32.mrf.mxu0
      %664 = vmatprep.mubr.bf16.mxu0 0
      %665 = vmatmul.mubr.bf16.gmra.mxu0 %v478
      %v666 = vpop.f32.mrf.mxu0
      %v667 = vadd.f32 %v281, %v666
      %v668 = vpop.f32.mrf.mxu0
      %v669 = vpop.f32.mrf.mxu0
      %v670 = vadd.f32 %v281, %v669
      %v671 = vpop.f32.mrf.mxu0
      %672 = vmatprep.mubr.bf16.mxu0 0
      %673 = vmatmul.mubr.bf16.gmra.mxu0 %v481
      %v674 = vpop.f32.mrf.mxu0
      %v675 = vadd.f32 %v281, %v674
      %v676 = vpop.f32.mrf.mxu0
      %v677 = vpop.f32.mrf.mxu0
      %v678 = vadd.f32 %v281, %v677
      %v679 = vpop.f32.mrf.mxu0
      %680 = vmatprep.mubr.bf16.mxu0 0
      %681 = vmatmul.mubr.bf16.gmra.mxu0 %v484
      %v682 = vpop.f32.mrf.mxu0
      %v683 = vadd.f32 %v281, %v682
      %v684 = vpop.f32.mrf.mxu0
      %v685 = vpop.f32.mrf.mxu0
      %v686 = vadd.f32 %v281, %v685
      %v687 = vpop.f32.mrf.mxu0
      %688 = vmatprep.mubr.bf16.mxu0 0
      %689 = vmatmul.mubr.bf16.gmra.mxu0 %v487
      %v690 = vpop.f32.mrf.mxu0
      %v691 = vadd.f32 %v281, %v690
      %v692 = vpop.f32.mrf.mxu0
      %v693 = vpop.f32.mrf.mxu0
      %v694 = vadd.f32 %v281, %v693
      %v695 = vpop.f32.mrf.mxu0
      %696 = vmatprep.mubr.bf16.mxu0 0
      %697 = vmatmul.mubr.bf16.gmra.mxu0 %v490
      %v698 = vpop.f32.mrf.mxu0
      %v699 = vadd.f32 %v281, %v698
      %v700 = vpop.f32.mrf.mxu0
      %v701 = vpop.f32.mrf.mxu0
      %v702 = vadd.f32 %v281, %v701
      %v703 = vpop.f32.mrf.mxu0
      %704 = vmatprep.mubr.bf16.mxu0 0
      %705 = vmatmul.mubr.bf16.gmra.mxu0 %v493
      %v706 = vpop.f32.mrf.mxu0
      %v707 = vadd.f32 %v281, %v706
      %v708 = vpop.f32.mrf.mxu0
      %v709 = vpop.f32.mrf.mxu0
      %v710 = vadd.f32 %v281, %v709
      %v711 = vpop.f32.mrf.mxu0
      %712 = vmatprep.mubr.bf16.mxu0 0
      %713 = vmatmul.mubr.bf16.gmra.mxu0 %v496
      %v714 = vpop.f32.mrf.mxu0
      %v715 = vadd.f32 %v281, %v714
      %v716 = vpop.f32.mrf.mxu0
      %v717 = vpop.f32.mrf.mxu0
      %v718 = vadd.f32 %v281, %v717
      %v719 = vpop.f32.mrf.mxu0
      %720 = vmatprep.mubr.bf16.mxu0 0
      %721 = vmatmul.mubr.bf16.gmra.mxu0 %v499
      %v722 = vpop.f32.mrf.mxu0
      %v723 = vadd.f32 %v281, %v722
      %v724 = vpop.f32.mrf.mxu0
      %v725 = vpop.f32.mrf.mxu0
      %v726 = vadd.f32 %v281, %v725
      %v727 = vpop.f32.mrf.mxu0
      %728 = vmatprep.mubr.bf16.mxu0 0
      %729 = vmatmul.mubr.bf16.gmra.mxu0 %v502
      %v730 = vpop.f32.mrf.mxu0
      %v731 = vadd.f32 %v281, %v730
      %v732 = vpop.f32.mrf.mxu0
      %v733 = vpop.f32.mrf.mxu0
      %v734 = vadd.f32 %v281, %v733
      %v735 = vpop.f32.mrf.mxu0
      %736 = vmatprep.mubr.bf16.mxu0 0
      %737 = vmatmul.mubr.bf16.gmra.mxu0 %v505
      %v738 = vpop.f32.mrf.mxu0
      %v739 = vadd.f32 %v281, %v738
      %v740 = vpop.f32.mrf.mxu0
      %v741 = vpop.f32.mrf.mxu0
      %v742 = vadd.f32 %v281, %v741
      %v743 = vpop.f32.mrf.mxu0
      %744 = vmatprep.mubr.bf16.mxu0 0
      %745 = vmatmul.mubr.bf16.gmra.mxu0 %v508
      %v746 = vpop.f32.mrf.mxu0
      %v747 = vadd.f32 %v281, %v746
      %v748 = vpop.f32.mrf.mxu0
      %v749 = vpop.f32.mrf.mxu0
      %v750 = vadd.f32 %v281, %v749
      %v751 = vpop.f32.mrf.mxu0
      %752 = vmatprep.mubr.bf16.mxu0 0
      %753 = vmatmul.mubr.bf16.gmra.mxu0 %v511
      %v754 = vpop.f32.mrf.mxu0
      %v755 = vadd.f32 %v281, %v754
      %v756 = vpop.f32.mrf.mxu0
      %v757 = vpop.f32.mrf.mxu0
      %v758 = vadd.f32 %v281, %v757
      %v759 = vpop.f32.mrf.mxu0
      %760 = vmatprep.mubr.bf16.mxu0 0
      %761 = vmatmul.mubr.bf16.gmra.mxu0 %v514
      %v762 = vpop.f32.mrf.mxu0
      %v763 = vadd.f32 %v281, %v762
      %v764 = vpop.f32.mrf.mxu0
      %v765 = vpop.f32.mrf.mxu0
      %v766 = vadd.f32 %v281, %v765
      %v767 = vpop.f32.mrf.mxu0
      %768 = vmatprep.mubr.bf16.mxu0 0
      %769 = vmatmul.mubr.bf16.gmra.mxu0 %v517
      %v770 = vpop.f32.mrf.mxu0
      %v771 = vadd.f32 %v281, %v770
      %v772 = vpop.f32.mrf.mxu0
      %v773 = vpop.f32.mrf.mxu0
      %v774 = vadd.f32 %v281, %v773
      %v775 = vpop.f32.mrf.mxu0
      %776 = vmatprep.mubr.bf16.mxu0 0
      %777 = vmatmul.mubr.bf16.gmra.mxu0 %v520
      %v778 = vpop.f32.mrf.mxu0
      %v779 = vadd.f32 %v281, %v778
      %v780 = vpop.f32.mrf.mxu0
      %v781 = vpop.f32.mrf.mxu0
      %v782 = vadd.f32 %v281, %v781
      %v783 = vpop.f32.mrf.mxu0
      %784 = vmatprep.mubr.bf16.mxu0 0
      %785 = vmatmul.mubr.bf16.gmra.mxu0 %v523
      %v786 = vpop.f32.mrf.mxu0
      %v787 = vadd.f32 %v281, %v786
      %v788 = vpop.f32.mrf.mxu0
      %v789 = vpop.f32.mrf.mxu0
      %v790 = vadd.f32 %v281, %v789
      %v791 = vpop.f32.mrf.mxu0
      %792 = vmatprep.mubr.bf16.mxu0 0
      %793 = vmatmul.mubr.bf16.gmra.mxu0 %v526
      %v794 = vpop.f32.mrf.mxu0
      %v795 = vadd.f32 %v281, %v794
      %v796 = vpop.f32.mrf.mxu0
      %v797 = vpop.f32.mrf.mxu0
      %v798 = vadd.f32 %v281, %v797
      %v799 = vpop.f32.mrf.mxu0
      %800 = vmatprep.mubr.bf16.mxu0 0
      %801 = vmatmul.mubr.bf16.gmra.mxu0 %v529
      %v802 = vpop.f32.mrf.mxu0
      %v803 = vadd.f32 %v281, %v802
      %v804 = vpop.f32.mrf.mxu0
      %v805 = vpop.f32.mrf.mxu0
      %v806 = vadd.f32 %v281, %v805
      %v807 = vpop.f32.mrf.mxu0
      %808 = vmatprep.mubr.bf16.mxu0 0
      %809 = vmatmul.mubr.bf16.gmra.mxu0 %v532
      %v810 = vpop.f32.mrf.mxu0
      %v811 = vadd.f32 %v281, %v810
      %v812 = vpop.f32.mrf.mxu0
      %v813 = vpop.f32.mrf.mxu0
      %v814 = vadd.f32 %v281, %v813
      %v815 = vpop.f32.mrf.mxu0
      %816 = vmatprep.mubr.bf16.mxu0 0
      %817 = vmatmul.mubr.bf16.gmra.mxu0 %v535
      %v818 = vpop.f32.mrf.mxu0
      %v819 = vadd.f32 %v281, %v818
      %v820 = vpop.f32.mrf.mxu0
      %v821 = vpop.f32.mrf.mxu0
      %v822 = vadd.f32 %v281, %v821
      %v823 = vpop.f32.mrf.mxu0
      %824 = vmatprep.mubr.bf16.mxu0 0
      %825 = vmatmul.mubr.bf16.gmra.mxu0 %v538
      %v826 = vpop.f32.mrf.mxu0
      %v827 = vadd.f32 %v281, %v826
      %v828 = vpop.f32.mrf.mxu0
      %v829 = vpop.f32.mrf.mxu0
      %v830 = vadd.f32 %v281, %v829
      %v831 = vpop.f32.mrf.mxu0
      %832 = vdwg.mxu0
      %v833 = vpack.c.bf16 %v582, %v579
      %v834 = vpack.c.bf16 %v590, %v587
      %v835 = vpack.c.bf16 %v598, %v595
      %v836 = vpack.c.bf16 %v606, %v603
      %v837 = vpack.c.bf16 %v614, %v611
      %v838 = vpack.c.bf16 %v622, %v619
      %v839 = vpack.c.bf16 %v630, %v627
      %v840 = vpack.c.bf16 %v638, %v635
      %v841 = vpack.c.bf16 %v646, %v643
      %v842 = vpack.c.bf16 %v654, %v651
      %v843 = vpack.c.bf16 %v662, %v659
      %v844 = vpack.c.bf16 %v670, %v667
      %v845 = vpack.c.bf16 %v678, %v675
      %v846 = vpack.c.bf16 %v686, %v683
      %v847 = vpack.c.bf16 %v694, %v691
      %v848 = vpack.c.bf16 %v702, %v699
      %v849 = vpack.c.bf16 %v710, %v707
      %v850 = vpack.c.bf16 %v718, %v715
      %v851 = vpack.c.bf16 %v726, %v723
      %v852 = vpack.c.bf16 %v734, %v731
      %v853 = vpack.c.bf16 %v742, %v739
      %v854 = vpack.c.bf16 %v750, %v747
      %v855 = vpack.c.bf16 %v758, %v755
      %v856 = vpack.c.bf16 %v766, %v763
      %v857 = vpack.c.bf16 %v774, %v771
      %v858 = vpack.c.bf16 %v782, %v779
      %v859 = vpack.c.bf16 %v790, %v787
      %v860 = vpack.c.bf16 %v798, %v795
      %v861 = vpack.c.bf16 %v806, %v803
      %v862 = vpack.c.bf16 %v814, %v811
      %v863 = vpack.c.bf16 %v822, %v819
      %v864 = vpack.c.bf16 %v830, %v827
      %v897 = vunpack.c.l.b16 %v833
      %v898 = vunpack.c.h.b16 %v833
      %v899 = vunpack.c.l.b16 %v834
      %v900 = vunpack.c.h.b16 %v834
      %v901 = vunpack.c.l.b16 %v835
      %v902 = vunpack.c.h.b16 %v835
      %v903 = vunpack.c.l.b16 %v836
      %v904 = vunpack.c.h.b16 %v836
      %v905 = vunpack.c.l.b16 %v837
      %v906 = vunpack.c.h.b16 %v837
      %v907 = vunpack.c.l.b16 %v838
      %v908 = vunpack.c.h.b16 %v838
      %v909 = vunpack.c.l.b16 %v839
      %v910 = vunpack.c.h.b16 %v839
      %v911 = vunpack.c.l.b16 %v840
      %v912 = vunpack.c.h.b16 %v840
      %v913 = vunpack.c.l.b16 %v841
      %v914 = vunpack.c.h.b16 %v841
      %v915 = vunpack.c.l.b16 %v842
      %v916 = vunpack.c.h.b16 %v842
      %v917 = vunpack.c.l.b16 %v843
      %v918 = vunpack.c.h.b16 %v843
      %v919 = vunpack.c.l.b16 %v844
      %v920 = vunpack.c.h.b16 %v844
      %v921 = vunpack.c.l.b16 %v845
      %v922 = vunpack.c.h.b16 %v845
      %v923 = vunpack.c.l.b16 %v846
      %v924 = vunpack.c.h.b16 %v846
      %v925 = vunpack.c.l.b16 %v847
      %v926 = vunpack.c.h.b16 %v847
      %v927 = vunpack.c.l.b16 %v848
      %v928 = vunpack.c.h.b16 %v848
      %v929 = vunpack.c.l.b16 %v849
      %v930 = vunpack.c.h.b16 %v849
      %v931 = vunpack.c.l.b16 %v850
      %v932 = vunpack.c.h.b16 %v850
      %v933 = vunpack.c.l.b16 %v851
      %v934 = vunpack.c.h.b16 %v851
      %v935 = vunpack.c.l.b16 %v852
      %v936 = vunpack.c.h.b16 %v852
      %v937 = vunpack.c.l.b16 %v853
      %v938 = vunpack.c.h.b16 %v853
      %v939 = vunpack.c.l.b16 %v854
      %v940 = vunpack.c.h.b16 %v854
      %v941 = vunpack.c.l.b16 %v855
      %v942 = vunpack.c.h.b16 %v855
      %v943 = vunpack.c.l.b16 %v856
      %v944 = vunpack.c.h.b16 %v856
      %v945 = vunpack.c.l.b16 %v857
      %v946 = vunpack.c.h.b16 %v857
      %v947 = vunpack.c.l.b16 %v858
      %v948 = vunpack.c.h.b16 %v858
      %v949 = vunpack.c.l.b16 %v859
      %v950 = vunpack.c.h.b16 %v859
      %v951 = vunpack.c.l.b16 %v860
      %v952 = vunpack.c.h.b16 %v860
      %v953 = vunpack.c.l.b16 %v861
      %v954 = vunpack.c.h.b16 %v861
      %v955 = vunpack.c.l.b16 %v862
      %v956 = vunpack.c.h.b16 %v862
      %v957 = vunpack.c.l.b16 %v863
      %v958 = vunpack.c.h.b16 %v863
      %v959 = vunpack.c.l.b16 %v864
      %v960 = vunpack.c.h.b16 %v864
      %v961 = vpack.c.b16 %v897, %v897
      %v962 = vpack.c.b16 %v898, %v898
      %v963 = vpack.c.b16 %v899, %v899
      %v964 = vpack.c.b16 %v900, %v900
      %v965 = vpack.c.b16 %v901, %v901
      %v966 = vpack.c.b16 %v902, %v902
      %v967 = vpack.c.b16 %v903, %v903
      %v968 = vpack.c.b16 %v904, %v904
      %v969 = vpack.c.b16 %v905, %v905
      %v970 = vpack.c.b16 %v906, %v906
      %v971 = vpack.c.b16 %v907, %v907
      %v972 = vpack.c.b16 %v908, %v908
      %v973 = vpack.c.b16 %v909, %v909
      %v974 = vpack.c.b16 %v910, %v910
      %v975 = vpack.c.b16 %v911, %v911
      %v976 = vpack.c.b16 %v912, %v912
      %v977 = vpack.c.b16 %v913, %v913
      %v978 = vpack.c.b16 %v914, %v914
      %v979 = vpack.c.b16 %v915, %v915
      %v980 = vpack.c.b16 %v916, %v916
      %v981 = vpack.c.b16 %v917, %v917
      %v982 = vpack.c.b16 %v918, %v918
      %v983 = vpack.c.b16 %v919, %v919
      %v984 = vpack.c.b16 %v920, %v920
      %v985 = vpack.c.b16 %v921, %v921
      %v986 = vpack.c.b16 %v922, %v922
      %v987 = vpack.c.b16 %v923, %v923
      %v988 = vpack.c.b16 %v924, %v924
      %v989 = vpack.c.b16 %v925, %v925
      %v990 = vpack.c.b16 %v926, %v926
      %v991 = vpack.c.b16 %v927, %v927
      %v992 = vpack.c.b16 %v928, %v928
      %v993 = vpack.c.b16 %v929, %v929
      %v994 = vpack.c.b16 %v930, %v930
      %v995 = vpack.c.b16 %v931, %v931
      %v996 = vpack.c.b16 %v932, %v932
      %v997 = vpack.c.b16 %v933, %v933
      %v998 = vpack.c.b16 %v934, %v934
      %v999 = vpack.c.b16 %v935, %v935
      %v1000 = vpack.c.b16 %v936, %v936
      %v1001 = vpack.c.b16 %v937, %v937
      %v1002 = vpack.c.b16 %v938, %v938
      %v1003 = vpack.c.b16 %v939, %v939
      %v1004 = vpack.c.b16 %v940, %v940
      %v1005 = vpack.c.b16 %v941, %v941
      %v1006 = vpack.c.b16 %v942, %v942
      %v1007 = vpack.c.b16 %v943, %v943
      %v1008 = vpack.c.b16 %v944, %v944
      %v1009 = vpack.c.b16 %v945, %v945
      %v1010 = vpack.c.b16 %v946, %v946
      %v1011 = vpack.c.b16 %v947, %v947
      %v1012 = vpack.c.b16 %v948, %v948
      %v1013 = vpack.c.b16 %v949, %v949
      %v1014 = vpack.c.b16 %v950, %v950
      %v1015 = vpack.c.b16 %v951, %v951
      %v1016 = vpack.c.b16 %v952, %v952
      %v1017 = vpack.c.b16 %v953, %v953
      %v1018 = vpack.c.b16 %v954, %v954
      %v1019 = vpack.c.b16 %v955, %v955
      %v1020 = vpack.c.b16 %v956, %v956
      %v1021 = vpack.c.b16 %v957, %v957
      %v1022 = vpack.c.b16 %v958, %v958
      %v1023 = vpack.c.b16 %v959, %v959
      %v1024 = vpack.c.b16 %v960, %v960
      %vm1089 = vcmask 19456
      %1090 = vst.msk [vmem:[%s208] sm:$0xf] %vm1089, %v961
      %1091 = vst.msk [vmem:[%s208 + $0x4] sm:$0xf] %vm1089, %v962
      %1092 = vst.msk [vmem:[%s208 + $0x8] sm:$0xf] %vm1089, %v963
      %1093 = vst.msk [vmem:[%s208 + $0xc] sm:$0xf] %vm1089, %v964
      %1094 = vst.msk [vmem:[%s208 + $0x10] sm:$0xf] %vm1089, %v965
      %1095 = vst.msk [vmem:[%s208 + $0x14] sm:$0xf] %vm1089, %v966
      %1096 = vst.msk [vmem:[%s208 + $0x18] sm:$0xf] %vm1089, %v967
      %1097 = vst.msk [vmem:[%s208 + $0x1c] sm:$0xf] %vm1089, %v968
      %1098 = vst.msk [vmem:[%s208 + $0x20] sm:$0xf] %vm1089, %v969
      %1099 = vst.msk [vmem:[%s208 + $0x24] sm:$0xf] %vm1089, %v970
      %1100 = vst.msk [vmem:[%s208 + $0x28] sm:$0xf] %vm1089, %v971
      %1101 = vst.msk [vmem:[%s208 + $0x2c] sm:$0xf] %vm1089, %v972
      %1102 = vst.msk [vmem:[%s208 + $0x30] sm:$0xf] %vm1089, %v973
      %1103 = vst.msk [vmem:[%s208 + $0x34] sm:$0xf] %vm1089, %v974
      %1104 = vst.msk [vmem:[%s208 + $0x38] sm:$0xf] %vm1089, %v975
      %1105 = vst.msk [vmem:[%s208 + $0x3c] sm:$0xf] %vm1089, %v976
      %1106 = vst.msk [vmem:[%s208 + $0x40] sm:$0xf] %vm1089, %v977
      %1107 = vst.msk [vmem:[%s208 + $0x44] sm:$0xf] %vm1089, %v978
      %1108 = vst.msk [vmem:[%s208 + $0x48] sm:$0xf] %vm1089, %v979
      %1109 = vst.msk [vmem:[%s208 + $0x4c] sm:$0xf] %vm1089, %v980
      %1110 = vst.msk [vmem:[%s208 + $0x50] sm:$0xf] %vm1089, %v981
      %1111 = vst.msk [vmem:[%s208 + $0x54] sm:$0xf] %vm1089, %v982
      %1112 = vst.msk [vmem:[%s208 + $0x58] sm:$0xf] %vm1089, %v983
      %1113 = vst.msk [vmem:[%s208 + $0x5c] sm:$0xf] %vm1089, %v984
      %1114 = vst.msk [vmem:[%s208 + $0x60] sm:$0xf] %vm1089, %v985
      %1115 = vst.msk [vmem:[%s208 + $0x64] sm:$0xf] %vm1089, %v986
      %1116 = vst.msk [vmem:[%s208 + $0x68] sm:$0xf] %vm1089, %v987
      %1117 = vst.msk [vmem:[%s208 + $0x6c] sm:$0xf] %vm1089, %v988
      %1118 = vst.msk [vmem:[%s208 + $0x70] sm:$0xf] %vm1089, %v989
      %1119 = vst.msk [vmem:[%s208 + $0x74] sm:$0xf] %vm1089, %v990
      %1120 = vst.msk [vmem:[%s208 + $0x78] sm:$0xf] %vm1089, %v991
      %1121 = vst.msk [vmem:[%s208 + $0x7c] sm:$0xf] %vm1089, %v992
      %1122 = vst.msk [vmem:[%s208 + $0x80] sm:$0xf] %vm1089, %v993
      %1123 = vst.msk [vmem:[%s208 + $0x84] sm:$0xf] %vm1089, %v994
      %1124 = vst.msk [vmem:[%s208 + $0x88] sm:$0xf] %vm1089, %v995
      %1125 = vst.msk [vmem:[%s208 + $0x8c] sm:$0xf] %vm1089, %v996
      %1126 = vst.msk [vmem:[%s208 + $0x90] sm:$0xf] %vm1089, %v997
      %1127 = vst.msk [vmem:[%s208 + $0x94] sm:$0xf] %vm1089, %v998
      %1128 = vst.msk [vmem:[%s208 + $0x98] sm:$0xf] %vm1089, %v999
      %1129 = vst.msk [vmem:[%s208 + $0x9c] sm:$0xf] %vm1089, %v1000
      %1130 = vst.msk [vmem:[%s208 + $0xa0] sm:$0xf] %vm1089, %v1001
      %1131 = vst.msk [vmem:[%s208 + $0xa4] sm:$0xf] %vm1089, %v1002
      %1132 = vst.msk [vmem:[%s208 + $0xa8] sm:$0xf] %vm1089, %v1003
      %1133 = vst.msk [vmem:[%s208 + $0xac] sm:$0xf] %vm1089, %v1004
      %1134 = vst.msk [vmem:[%s208 + $0xb0] sm:$0xf] %vm1089, %v1005
      %1135 = vst.msk [vmem:[%s208 + $0xb4] sm:$0xf] %vm1089, %v1006
      %1136 = vst.msk [vmem:[%s208 + $0xb8] sm:$0xf] %vm1089, %v1007
      %1137 = vst.msk [vmem:[%s208 + $0xbc] sm:$0xf] %vm1089, %v1008
      %1138 = vst.msk [vmem:[%s208 + $0xc0] sm:$0xf] %vm1089, %v1009
      %1139 = vst.msk [vmem:[%s208 + $0xc4] sm:$0xf] %vm1089, %v1010
      %1140 = vst.msk [vmem:[%s208 + $0xc8] sm:$0xf] %vm1089, %v1011
      %1141 = vst.msk [vmem:[%s208 + $0xcc] sm:$0xf] %vm1089, %v1012
      %1142 = vst.msk [vmem:[%s208 + $0xd0] sm:$0xf] %vm1089, %v1013
      %1143 = vst.msk [vmem:[%s208 + $0xd4] sm:$0xf] %vm1089, %v1014
      %1144 = vst.msk [vmem:[%s208 + $0xd8] sm:$0xf] %vm1089, %v1015
      %1145 = vst.msk [vmem:[%s208 + $0xdc] sm:$0xf] %vm1089, %v1016
      %1146 = vst.msk [vmem:[%s208 + $0xe0] sm:$0xf] %vm1089, %v1017
      %1147 = vst.msk [vmem:[%s208 + $0xe4] sm:$0xf] %vm1089, %v1018
      %1148 = vst.msk [vmem:[%s208 + $0xe8] sm:$0xf] %vm1089, %v1019
      %1149 = vst.msk [vmem:[%s208 + $0xec] sm:$0xf] %vm1089, %v1020
      %1150 = vst.msk [vmem:[%s208 + $0xf0] sm:$0xf] %vm1089, %v1021
      %1151 = vst.msk [vmem:[%s208 + $0xf4] sm:$0xf] %vm1089, %v1022
      %1152 = vst.msk [vmem:[%s208 + $0xf8] sm:$0xf] %vm1089, %v1023
      %1153 = vst.msk [vmem:[%s208 + $0xfc] sm:$0xf] %vm1089, %v1024
      %s1154 = smul.u32 64, %s19
      %p1155 = scmp.lt.s32.totalorder %s18, 1
      %s1156 = scalar_select %p1155, %s18, 1
      %p1157 = scmp.lt.s32.totalorder %s1154, 127
      %s1158 = scalar_select %p1157, %s1154, 127
      %s1159 = smul.addr %s1156, 128
      %s1160 = sadd.s32 %s1158, %s1159
      %s1161 = smul.addr %s1160, 4
      %s1162 = scalar_lea.vmem %s3, %s1161
      // Predicated region
      $region33: #{tpu_custom_call.1} parent=31 // pred_check
        %p1163 = pneg %p116
      $region34: #{tpu_custom_call.1} parent=31 // pred_check_branch
        %1165 = sbr.rel (%p1163) target = $region36
      $region35: #{tpu_custom_call.1} parent=31 // pred_region
        %s1166 = smul.u32 64, %s19
      $region36: #{tpu_custom_call.1} parent=31 // pred_fallthru
        _
    $region32: #{tpu_custom_call.1} parent=5 // pred_fallthru
      _
    %p1167 = scmp.le.s32.totalorder 2, %s9
    // Predicated region
    $region37: #{tpu_custom_call.1} parent=5 // pred_check
      %p1168 = pneg %p1167
    $region38: #{tpu_custom_call.1} parent=5 // pred_check_branch
      %1170 = sbr.rel (%p1168) target = $region40
    $region39: #{tpu_custom_call.1} parent=5 // pred_region
      %s1171 = ssub.s32 %s9, 2
      // Predicated region
      $region41: #{tpu_custom_call.1} parent=39 // pred_check
        %p1172 = pneg %p122
      $region42: #{tpu_custom_call.1} parent=39 // pred_check_branch
        %1174 = sbr.rel (%p1172) target = $region44
      $region43: #{tpu_custom_call.1} parent=39 // pred_region
        %s1175 = smul.u32 64, %s21
        %p1176 = scmp.lt.s32.totalorder %s20, 1
        %s1177 = scalar_select %p1176, %s20, 1
        %p1178 = scmp.lt.s32.totalorder %s1175, 127
        %s1179 = scalar_select %p1178, %s1175, 127
        %s1180 = smul.addr %s1177, 128
        %s1181 = sadd.s32 %s1179, %s1180
        %s1182 = smul.addr %s1181, 4
        %s1183 = scalar_lea.vmem %s3, %s1182
      $region44: #{tpu_custom_call.1} parent=39 // pred_fallthru
        _
    $region40: #{tpu_custom_call.1} parent=5 // pred_fallthru
      _
  $region6: #{tpu_custom_call.1} parent=0 // loop_footer
    %s13 = sadd.s32 1, %s9
  $region7: #{tpu_custom_call.1} parent=0 // loop_footer_branch
    %8 = sbr.rel target = $region3
  $region8: #{tpu_custom_call.1} parent=0 // loop_exit
    _

</llo_original>
